<compile_context>
chip_gen: v7x
topology: tpu7x:2x2x1
jax: 0.10.0
libtpu: 0.0.40
codegen_flags: <defaults>
</compile_context>

<pallas_src>
import functools

import jax
import jax.numpy as jnp
from jax.experimental import pallas as pl
from jax.experimental.pallas import tpu as pltpu


_INV_SQRT2 = 0.7071067811865476  # 1/sqrt(2) for exact (erf) GELU


def _head_transform_kernel(x_ref, w_ref, b_ref, gamma_ref, beta_ref, o_ref, *, eps):
    # x_ref: (TM, H), w_ref: (H, H), b/gamma/beta: (1, H), o_ref: (TM, H)

    # Dense: x @ W with f32 accumulation.  No upfront .astype on x/W: the resident
    # (H, H) weight is NOT re-cast every grid step, and bf16 operands go straight
    # into the bf16 MXU on v6e/v7x (f32 operands stay exact-f32).
    y = jnp.dot(x_ref[...], w_ref[...], preferred_element_type=jnp.float32)
    y = y + b_ref[...].astype(jnp.float32)

    # Exact GELU (matches torch.nn.GELU() default, approximate='none').
    y = 0.5 * y * (1.0 + jax.lax.erf(y * _INV_SQRT2))

    # LayerNorm over the hidden axis (biased variance, eps=1e-5 like torch default).
    mean = jnp.mean(y, axis=-1, keepdims=True)
    centered = y - mean
    var = jnp.mean(centered * centered, axis=-1, keepdims=True)
    inv = jax.lax.rsqrt(var + eps)
    out = centered * inv * gamma_ref[...].astype(jnp.float32) + beta_ref[...].astype(jnp.float32)

    o_ref[...] = out.astype(o_ref.dtype)


def _round_up(x, m):
    return (x + m - 1) // m * m


def prediction_head_transform(hidden_states, w, b, gamma, beta, *, eps=1e-5, tm=256):
    """hidden_states: [B, S, H]; w: [H, H] (nn.Linear weight, (out, in)); b/gamma/beta: [H]."""
    B, S, H = hidden_states.shape
    R = B * S
    x2d = hidden_states.reshape(R, H)

    # Effective row tile: a multiple of 8 sublanes, no larger than the (padded) row count.
    # Default 256 keeps x/out tiles + the resident weight inside even v5e's 16 MiB
    # default scoped VMEM for H=1024 f32, while being large enough to be MXU-bound.
    tm_eff = min(_round_up(tm, 8), _round_up(R, 8))
    r_pad = _round_up(R, tm_eff)
    if r_pad != R:
        # Pad rows so any (B, S) works with the performance-optimal tile; padded rows are
        # computed (finite values) and sliced off afterwards.
        x2d = jnp.pad(x2d, ((0, r_pad - R), (0, 0)))

    # nn.Linear computes x @ W^T + b; pre-transpose W so the kernel does a plain x @ W.
    w_t = w.T
    b2d = b.reshape(1, H)
    g2d = gamma.reshape(1, H)
    bt2d = beta.reshape(1, H)

    kernel = functools.partial(_head_transform_kernel, eps=eps)

    # NOTE: weight/bias/gamma/beta have constant index_maps, so Pallas only DMAs them on
    # the first grid step (no re-fetch across steps).
    # TODO(synk): for H > ~2048 add a K grid axis with an f32 accumulator scratch instead
    # of keeping the full (H, H) weight resident in VMEM.
    out2d = pl.pallas_call(
        kernel,
        out_shape=jax.ShapeDtypeStruct((r_pad, H), hidden_states.dtype),
        grid_spec=pltpu.PrefetchScalarGridSpec(
            num_scalar_prefetch=0,
            grid=(r_pad // tm_eff,),
            in_specs=[
                pl.BlockSpec((tm_eff, H), lambda i: (i, 0)),  # x row tile
                pl.BlockSpec((H, H), lambda i: (0, 0)),       # weight (resident)
                pl.BlockSpec((1, H), lambda i: (0, 0)),       # bias
                pl.BlockSpec((1, H), lambda i: (0, 0)),       # layernorm gamma
                pl.BlockSpec((1, H), lambda i: (0, 0)),       # layernorm beta
            ],
            out_specs=pl.BlockSpec((tm_eff, H), lambda i: (i, 0)),
        ),
        compiler_params=pltpu.CompilerParams(
            dimension_semantics=("parallel",),
            vmem_limit_bytes=64 * 1024 * 1024,
        ),
    )(x2d, w_t, b2d, g2d, bt2d)

    if r_pad != R:
        out2d = out2d[:R]
    return out2d.reshape(B, S, H)


if __name__ == "__main__":
    B, S, H = 2, 8, 32

    key = jax.random.PRNGKey(0)
    k_x, k_w, k_b = jax.random.split(key, 3)

    hidden_states = jax.random.normal(k_x, (B, S, H), dtype=jnp.float32)
    # nn.Linear(H, H): weight (H, H), bias (H); LayerNorm(H): gamma ones, beta zeros.
    w = jax.random.normal(k_w, (H, H), dtype=jnp.float32) * (1.0 / jnp.sqrt(H))
    b = jax.random.normal(k_b, (H,), dtype=jnp.float32) * 0.01
    gamma = jnp.ones((H,), dtype=jnp.float32)
    beta = jnp.zeros((H,), dtype=jnp.float32)

    out = prediction_head_transform(hidden_states, w, b, gamma, beta)
    jax.block_until_ready(out)

    # Pure-JAX reference check (exact GELU, biased-variance LayerNorm, eps=1e-5).
    ref = hidden_states @ w.T + b
    ref = 0.5 * ref * (1.0 + jax.lax.erf(ref / jnp.sqrt(2.0)))
    mu = ref.mean(-1, keepdims=True)
    var = ((ref - mu) ** 2).mean(-1, keepdims=True)
    ref = (ref - mu) * jax.lax.rsqrt(var + 1e-5) * gamma + beta
    assert jnp.allclose(out, ref, atol=1e-5, rtol=1e-5), "mismatch vs reference"

    print("KERNEL_OK")
</pallas_src>

<mosaic_0001>
module attributes {stable_mosaic.version = 11 : i64} {
  func.func @_head_transform_kernel(%arg0: i32, %arg1: memref<16x32xf32, #tpu.memory_space<vmem>>, %arg2: memref<32x32xf32, #tpu.memory_space<vmem>>, %arg3: memref<1x32xf32, #tpu.memory_space<vmem>>, %arg4: memref<1x32xf32, #tpu.memory_space<vmem>>, %arg5: memref<1x32xf32, #tpu.memory_space<vmem>>, %arg6: memref<16x32xf32, #tpu.memory_space<vmem>>) attributes {dimension_semantics = [#tpu.dimension_semantics<parallel>], iteration_bounds = array<i64: 1>, scalar_prefetch = 0 : i64, scratch_operands = 0 : i64, tpu.core_type = #tpu.core_type<tc>, window_params = [{transform_indices = @transform_0, window_bounds = array<i64: 16, 32>}, {pipeline_mode = #tpu.pipeline_mode<synchronous>, transform_indices = @transform_1, window_bounds = array<i64: 32, 32>}, {pipeline_mode = #tpu.pipeline_mode<synchronous>, transform_indices = @transform_2, window_bounds = array<i64: 1, 32>}, {pipeline_mode = #tpu.pipeline_mode<synchronous>, transform_indices = @transform_3, window_bounds = array<i64: 1, 32>}, {pipeline_mode = #tpu.pipeline_mode<synchronous>, transform_indices = @transform_4, window_bounds = array<i64: 1, 32>}, {transform_indices = @transform_5, window_bounds = array<i64: 16, 32>}]} {
    %c0 = arith.constant 0 : index
    %c0_0 = arith.constant 0 : index
    %0 = vector.load %arg1[%c0, %c0_0] : memref<16x32xf32, #tpu.memory_space<vmem>>, vector<16x32xf32>
    %c0_1 = arith.constant 0 : index
    %c0_2 = arith.constant 0 : index
    %1 = vector.load %arg2[%c0_1, %c0_2] : memref<32x32xf32, #tpu.memory_space<vmem>>, vector<32x32xf32>
    %cst = arith.constant dense<0.000000e+00> : vector<16x32xf32>
    %2 = tpu.matmul %0, %1, %cst {dimension_numbers = #tpu.dot_dimension_numbers<[1], [0], [0], [1], [0, 0, 1, 1], [], []>} : vector<16x32xf32>, vector<32x32xf32>, vector<16x32xf32> -> vector<16x32xf32>
    %c0_3 = arith.constant 0 : index
    %c0_4 = arith.constant 0 : index
    %3 = vector.load %arg3[%c0_3, %c0_4] : memref<1x32xf32, #tpu.memory_space<vmem>>, vector<1x32xf32>
    %4 = vector.broadcast %3 : vector<1x32xf32> to vector<16x32xf32>
    %5 = arith.addf %2, %4 : vector<16x32xf32>
    %cst_5 = arith.constant 5.000000e-01 : f32
    %6 = vector.broadcast %cst_5 : f32 to vector<16x32xf32>
    %7 = arith.mulf %6, %5 : vector<16x32xf32>
    %cst_6 = arith.constant 0.707106769 : f32
    %8 = vector.broadcast %cst_6 : f32 to vector<16x32xf32>
    %9 = arith.mulf %5, %8 : vector<16x32xf32>
    %10 = math.erf %9 : vector<16x32xf32>
    %cst_7 = arith.constant 1.000000e+00 : f32
    %11 = vector.broadcast %cst_7 : f32 to vector<16x32xf32>
    %12 = arith.addf %11, %10 : vector<16x32xf32>
    %13 = arith.mulf %7, %12 : vector<16x32xf32>
    %cst_8 = arith.constant dense<0.000000e+00> : vector<16xf32>
    %14 = vector.multi_reduction <add>, %13, %cst_8 [1] : vector<16x32xf32> to vector<16xf32>
    %15 = vector.shape_cast %14 : vector<16xf32> to vector<16x1xf32>
    %cst_9 = arith.constant 3.200000e+01 : f32
    %16 = vector.broadcast %cst_9 : f32 to vector<16x1xf32>
    %17 = arith.divf %15, %16 : vector<16x1xf32>
    %18 = vector.broadcast %17 : vector<16x1xf32> to vector<16x32xf32>
    %19 = arith.subf %13, %18 : vector<16x32xf32>
    %20 = arith.mulf %19, %19 : vector<16x32xf32>
    %cst_10 = arith.constant dense<0.000000e+00> : vector<16xf32>
    %21 = vector.multi_reduction <add>, %20, %cst_10 [1] : vector<16x32xf32> to vector<16xf32>
    %22 = vector.shape_cast %21 : vector<16xf32> to vector<16x1xf32>
    %cst_11 = arith.constant 3.200000e+01 : f32
    %23 = vector.broadcast %cst_11 : f32 to vector<16x1xf32>
    %24 = arith.divf %22, %23 : vector<16x1xf32>
    %cst_12 = arith.constant 9.99999974E-6 : f32
    %25 = vector.broadcast %cst_12 : f32 to vector<16x1xf32>
    %26 = arith.addf %24, %25 : vector<16x1xf32>
    %27 = math.rsqrt %26 : vector<16x1xf32>
    %28 = vector.broadcast %27 : vector<16x1xf32> to vector<16x32xf32>
    %29 = arith.mulf %19, %28 : vector<16x32xf32>
    %c0_13 = arith.constant 0 : index
    %c0_14 = arith.constant 0 : index
    %30 = vector.load %arg4[%c0_13, %c0_14] : memref<1x32xf32, #tpu.memory_space<vmem>>, vector<1x32xf32>
    %31 = vector.broadcast %30 : vector<1x32xf32> to vector<16x32xf32>
    %32 = arith.mulf %29, %31 : vector<16x32xf32>
    %c0_15 = arith.constant 0 : index
    %c0_16 = arith.constant 0 : index
    %33 = vector.load %arg5[%c0_15, %c0_16] : memref<1x32xf32, #tpu.memory_space<vmem>>, vector<1x32xf32>
    %34 = vector.broadcast %33 : vector<1x32xf32> to vector<16x32xf32>
    %35 = arith.addf %32, %34 : vector<16x32xf32>
    %c0_17 = arith.constant 0 : index
    %c0_18 = arith.constant 0 : index
    %36 = vector.load %arg6[%c0_17, %c0_18] : memref<16x32xf32, #tpu.memory_space<vmem>>, vector<16x32xf32>
    tpu.vector_store %arg6[%c0_17, %c0_18], %35 {strides = array<i32>} : memref<16x32xf32, #tpu.memory_space<vmem>>, vector<16x32xf32>,
    return
  }
  func.func @transform_0(%arg0: i32) -> (i32, i32) {
    %c0_i32 = arith.constant 0 : i32
    %c0_i32_0 = arith.constant 0 : i32
    return %arg0, %c0_i32 : i32, i32
  }
  func.func @transform_1(%arg0: i32) -> (i32, i32) {
    %c0_i32 = arith.constant 0 : i32
    %c0_i32_0 = arith.constant 0 : i32
    %c0_i32_1 = arith.constant 0 : i32
    return %c0_i32, %c0_i32_0 : i32, i32
  }
  func.func @transform_2(%arg0: i32) -> (i32, i32) {
    %c0_i32 = arith.constant 0 : i32
    %c0_i32_0 = arith.constant 0 : i32
    %c0_i32_1 = arith.constant 0 : i32
    return %c0_i32, %c0_i32_0 : i32, i32
  }
  func.func @transform_3(%arg0: i32) -> (i32, i32) {
    %c0_i32 = arith.constant 0 : i32
    %c0_i32_0 = arith.constant 0 : i32
    %c0_i32_1 = arith.constant 0 : i32
    return %c0_i32, %c0_i32_0 : i32, i32
  }
  func.func @transform_4(%arg0: i32) -> (i32, i32) {
    %c0_i32 = arith.constant 0 : i32
    %c0_i32_0 = arith.constant 0 : i32
    %c0_i32_1 = arith.constant 0 : i32
    return %c0_i32, %c0_i32_0 : i32, i32
  }
  func.func @transform_5(%arg0: i32) -> (i32, i32) {
    %c0_i32 = arith.constant 0 : i32
    %c0_i32_0 = arith.constant 0 : i32
    return %arg0, %c0_i32 : i32, i32
  }
}

</mosaic_0001>

<llo_original>
// kernel: tpu_custom_call.1
$region0: #{tpu_custom_call.1}
  #allocation0 [shape = 'u32[]', space=smem, size = 0x4, offset = 0x4, fixed_abs, tag = 'smem constant byte address 0x4 - core index']
  #allocation1 [shape = 'u32[144,128]{1,0:T(1,128)}', space=vmem, size = 0x12000, scoped, tag = 'internal scratch']
  %s0 = inlined_call_operand.hbm [shape: f32[16,32], index: 0, kind: input, shape index: {}]
  %s1 = inlined_call_operand.hbm [shape: f32[32,32], index: 1, kind: input, shape index: {}]
  %s2 = inlined_call_operand.hbm [shape: f32[1,32], index: 2, kind: input, shape index: {}]
  %s3 = inlined_call_operand.hbm [shape: f32[1,32], index: 3, kind: input, shape index: {}]
  %s4 = inlined_call_operand.hbm [shape: f32[1,32], index: 4, kind: input, shape index: {}]
  %s5 = inlined_call_operand.hbm [shape: f32[16,32], index: 5, kind: output, shape index: {}]
  %s6 = sld [smem:[#allocation0]]
  $region50: #{tpu_custom_call.1} parent=0
    _
  %s8 = ssub.s32 1, %s6
  %s9 = scalar_select 0, %s8, %s6
  $region1: #{tpu_custom_call.1} parent=0
    #allocation2 [shape = 'u8[8192]{0}', space=vmem, size = 0x2000, scoped, tag = 'input window, operand 0, single buffered']
    #allocation3 [shape = 's32[1]{0}', space=sflag, size = 0x4, scoped, tag = 'scoped memory for tpu_custom_call.1']
    #allocation4 [shape = 's32[1]{0}', space=sflag, size = 0x4, scoped, tag = 'scoped memory for tpu_custom_call.1']
    #allocation5 [shape = 'u8[16384]{0}', space=vmem, size = 0x4000, scoped, tag = 'input window, operand 1, single buffered']
    #allocation6 [shape = 's32[1]{0}', space=sflag, size = 0x4, scoped, tag = 'scoped memory for tpu_custom_call.1']
    #allocation7 [shape = 'u8[512]{0}', space=vmem, size = 0x400, scoped, tag = 'input window, operand 2, single buffered']
    #allocation8 [shape = 'u8[512]{0}', space=vmem, size = 0x400, scoped, tag = 'input window, operand 3, single buffered']
    #allocation9 [shape = 's32[1]{0}', space=sflag, size = 0x4, scoped, tag = 'scoped memory for tpu_custom_call.1']
    #allocation10 [shape = 'u8[512]{0}', space=vmem, size = 0x400, scoped, tag = 'input window, operand 4, single buffered']
    #allocation11 [shape = 'u8[8192]{0}', space=vmem, size = 0x2000, scoped, tag = 'output window, operand 0, single buffered']
    %10 = vsyncpa [#allocation3], 0
    %11 = vsyncpa [#allocation6], 0
    %12 = vsyncpa [#allocation9], 0
    %13 = vsyncpa [#allocation4], 0
    // Predicated region
    $region2: #{tpu_custom_call.1} parent=1 // pred_check
      _
    $region3: #{tpu_custom_call.1} parent=1 // pred_check_branch
      %15 = sbr.rel (0) target = $region5
    $region4: #{tpu_custom_call.1} parent=1 // pred_region
      %s17 = ssub.s32 256, 256
      %18 = vsyncadd [#allocation3], %s17
      %s19 = sshll.u32 [#allocation2], 4
      %s20 = int_to_ptr.vmem [resolvable:$true] %s19
      %25 = dma.hbm_to_vmem [thread:$0]  %s0, 256, %s20, [#allocation3], 128, 128, 8
    $region5: #{tpu_custom_call.1} parent=1 // pred_fallthru
      _
    // Predicated region
    $region6: #{tpu_custom_call.1} parent=1 // pred_check
      _
    $region7: #{tpu_custom_call.1} parent=1 // pred_check_branch
      %27 = sbr.rel (0) target = $region9
    $region8: #{tpu_custom_call.1} parent=1 // pred_region
      %s29 = ssub.s32 512, 512
      %30 = vsyncadd [#allocation6], %s29
      %s31 = sshll.u32 [#allocation5], 4
      %s32 = int_to_ptr.vmem [resolvable:$true] %s31
      %37 = dma.hbm_to_vmem [thread:$0]  %s1, 512, %s32, [#allocation6], 128, 128, 8
    $region9: #{tpu_custom_call.1} parent=1 // pred_fallthru
      _
    // Predicated region
    $region10: #{tpu_custom_call.1} parent=1 // pred_check
      _
    $region11: #{tpu_custom_call.1} parent=1 // pred_check_branch
      %39 = sbr.rel (0) target = $region13
    $region12: #{tpu_custom_call.1} parent=1 // pred_region
      %s41 = ssub.s32 16, 16
      %42 = vsyncadd [#allocation6], %s41
      %s44 = sshll.u32 [#allocation7], 4
      %s45 = int_to_ptr.vmem [resolvable:$true] %s44
      %47 = dma.hbm_to_vmem [thread:$0]  %s2, 16, %s45, [#allocation6]
    $region13: #{tpu_custom_call.1} parent=1 // pred_fallthru
      _
    // Predicated region
    $region14: #{tpu_custom_call.1} parent=1 // pred_check
      _
    $region15: #{tpu_custom_call.1} parent=1 // pred_check_branch
      %49 = sbr.rel (0) target = $region17
    $region16: #{tpu_custom_call.1} parent=1 // pred_region
      %s51 = ssub.s32 16, 16
      %52 = vsyncadd [#allocation9], %s51
      %s54 = sshll.u32 [#allocation8], 4
      %s55 = int_to_ptr.vmem [resolvable:$true] %s54
      %57 = dma.hbm_to_vmem [thread:$0]  %s3, 16, %s55, [#allocation9]
    $region17: #{tpu_custom_call.1} parent=1 // pred_fallthru
      _
    // Predicated region
    $region18: #{tpu_custom_call.1} parent=1 // pred_check
      _
    $region19: #{tpu_custom_call.1} parent=1 // pred_check_branch
      %59 = sbr.rel (0) target = $region21
    $region20: #{tpu_custom_call.1} parent=1 // pred_region
      %s61 = ssub.s32 16, 16
      %62 = vsyncadd [#allocation9], %s61
      %s64 = sshll.u32 [#allocation10], 4
      %s65 = int_to_ptr.vmem [resolvable:$true] %s64
      %67 = dma.hbm_to_vmem [thread:$0]  %s4, 16, %s65, [#allocation9]
    $region21: #{tpu_custom_call.1} parent=1 // pred_fallthru
      _
    // Predicated region
    $region22: #{tpu_custom_call.1} parent=1 // pred_check
      _
    $region23: #{tpu_custom_call.1} parent=1 // pred_check_branch
      %69 = sbr.rel (0) target = $region25
    $region24: #{tpu_custom_call.1} parent=1 // pred_region
      %70 = dma.done [#allocation3], 256
    $region25: #{tpu_custom_call.1} parent=1 // pred_fallthru
      _
    // Predicated region
    $region26: #{tpu_custom_call.1} parent=1 // pred_check
      _
    $region27: #{tpu_custom_call.1} parent=1 // pred_check_branch
      %72 = sbr.rel (0) target = $region29
    $region28: #{tpu_custom_call.1} parent=1 // pred_region
      %73 = dma.done [#allocation6], 512
    $region29: #{tpu_custom_call.1} parent=1 // pred_fallthru
      _
    // Predicated region
    $region30: #{tpu_custom_call.1} parent=1 // pred_check
      _
    $region31: #{tpu_custom_call.1} parent=1 // pred_check_branch
      %75 = sbr.rel (0) target = $region33
    $region32: #{tpu_custom_call.1} parent=1 // pred_region
      %76 = dma.done [#allocation6], 16
    $region33: #{tpu_custom_call.1} parent=1 // pred_fallthru
      _
    // Predicated region
    $region34: #{tpu_custom_call.1} parent=1 // pred_check
      _
    $region35: #{tpu_custom_call.1} parent=1 // pred_check_branch
      %78 = sbr.rel (0) target = $region37
    $region36: #{tpu_custom_call.1} parent=1 // pred_region
      %79 = dma.done [#allocation9], 16
    $region37: #{tpu_custom_call.1} parent=1 // pred_fallthru
      _
    // Predicated region
    $region38: #{tpu_custom_call.1} parent=1 // pred_check
      _
    $region39: #{tpu_custom_call.1} parent=1 // pred_check_branch
      %81 = sbr.rel (0) target = $region41
    $region40: #{tpu_custom_call.1} parent=1 // pred_region
      %82 = dma.done [#allocation9], 16
    $region41: #{tpu_custom_call.1} parent=1 // pred_fallthru
      _
    %v83 = vld [vmem:[#allocation2] sm:$0xff]
    %v84 = vld [vmem:[#allocation2 + $0x8] sm:$0xff]
    %v85 = vld [vmem:[#allocation5] sm:$0xff]
    %v86 = vld [vmem:[#allocation5 + $0x8] sm:$0xff]
    %v87 = vld [vmem:[#allocation5 + $0x10] sm:$0xff]
    %v88 = vld [vmem:[#allocation5 + $0x18] sm:$0xff]
    %v89 = vld [vmem:[#allocation7] sm:$0x1]
    %v91 = vlaneseq
    %v92 = vshrl.u32 %v91, 7
    %v93 = vsub.s32 0, %v92
    %v94 = vrot.slane %v89, %v93
    %vm96 = vcmask 261120
    %v98 = vsel %vm96, %v83, 0
    %v101 = vsel %vm96, %v84, 0
    %103 = vmatprep.subr.mxu0 0.0
    %104 = vmatpush1.msra.mxu0 %v85
    %105 = vmatprep.subr.mxu0 0.0
    %106 = vmatpush1.msra.mxu0 %v86
    %107 = vmatprep.subr.mxu0 0.0
    %108 = vmatpush1.msra.mxu0 %v87
    %109 = vmatprep.subr.mxu0 0.0
    %110 = vmatpush1.msra.mxu0 %v88
    %111 = vmatprep.subr.mxu0 0.0
    %112 = vmatpush1.msra.mxu0 0.0
    %113 = vmatprep.subr.mxu0 0.0
    %114 = vmatpush1.msra.mxu0 0.0
    %115 = vmatprep.subr.mxu0 0.0
    %116 = vmatpush1.msra.mxu0 0.0
    %117 = vmatprep.subr.mxu0 0.0
    %118 = vmatpush1.msra.mxu0 0.0
    %119 = vmatprep.subr.mxu0 0.0
    %120 = vmatpush1.msra.mxu0 0.0
    %121 = vmatprep.subr.mxu0 0.0
    %122 = vmatpush1.msra.mxu0 0.0
    %123 = vmatprep.subr.mxu0 0.0
    %124 = vmatpush1.msra.mxu0 0.0
    %125 = vmatprep.subr.mxu0 0.0
    %126 = vmatpush1.msra.mxu0 0.0
    %127 = vmatprep.subr.mxu0 0.0
    %128 = vmatpush1.msra.mxu0 0.0
    %129 = vmatprep.subr.mxu0 0.0
    %130 = vmatpush1.msra.mxu0 0.0
    %131 = vmatprep.subr.mxu0 0.0
    %132 = vmatpush1.msra.mxu0 0.0
    %133 = vmatprep.subr.mxu0 0.0
    %134 = vmatpush1.msra.mxu0 0.0
    %135 = vmatprep.subr.mxu0 0.0
    %136 = vmatpush1.msra.mxu0 0.0
    %137 = vmatprep.subr.mxu0 0.0
    %138 = vmatpush1.msra.mxu0 0.0
    %139 = vmatprep.subr.mxu0 0.0
    %140 = vmatpush1.msra.mxu0 0.0
    %141 = vmatprep.subr.mxu0 0.0
    %142 = vmatpush1.msra.mxu0 0.0
    %143 = vmatprep.subr.mxu0 0.0
    %144 = vmatpush1.msra.mxu0 0.0
    %145 = vmatprep.subr.mxu0 0.0
    %146 = vmatpush1.msra.mxu0 0.0
    %147 = vmatprep.subr.mxu0 0.0
    %148 = vmatpush1.msra.mxu0 0.0
    %149 = vmatprep.subr.mxu0 0.0
    %150 = vmatpush1.msra.mxu0 0.0
    %151 = vmatprep.subr.mxu0 0.0
    %152 = vmatpush1.msra.mxu0 0.0
    %153 = vmatprep.subr.mxu0 0.0
    %154 = vmatpush1.msra.mxu0 0.0
    %155 = vmatprep.subr.mxu0 0.0
    %156 = vmatpush1.msra.mxu0 0.0
    %157 = vmatprep.subr.mxu0 0.0
    %158 = vmatpush1.msra.mxu0 0.0
    %159 = vmatprep.subr.mxu0 0.0
    %160 = vmatpush1.msra.mxu0 0.0
    %161 = vmatprep.subr.mxu0 0.0
    %162 = vmatpush1.msra.mxu0 0.0
    %163 = vmatprep.subr.mxu0 0.0
    %164 = vmatpush1.msra.mxu0 0.0
    %165 = vmatprep.subr.mxu0 0.0
    %166 = vmatpush1.msra.mxu0 0.0
    %167 = vmatprep.mubr.f32.mxu0 0.0
    %168 = vmatmul.mubr.f32.gmra.mrb[0].mxu0 %v98
    %v169 = vpop.f32.mrb[0].mxu0
    %v170 = vadd.f32 %v94, %v169
    %v171 = vpop.f32.mrb[0].mxu0
    %172 = vmatprep.mubr.f32.mxu0 0.0
    %173 = vmatmul.mubr.f32.gmra.mrb[0].mxu0 %v101
    %v174 = vpop.f32.mrb[0].mxu0
    %v175 = vadd.f32 %v94, %v174
    %v176 = vpop.f32.mrb[0].mxu0
    %177 = vdwg.mxu0
    %v178 = vmul.f32 %v170, 0.5
    %v179 = vmul.f32 %v175, 0.5
    %v180 = vmul.f32 %v170, 0.70710677
    %v181 = vmul.f32 %v175, 0.70710677
    %v182 = verf.f32.pop %v180
    %v183 = verf.f32.pop %v181
    %v184 = vadd.f32 %v182, 1.0
    %v185 = vadd.f32 %v183, 1.0
    %v186 = vmul.f32 %v178, %v184
    %v187 = vmul.f32 %v179, %v185
    %v188 = vsel %vm96, %v186, 0.0
    %189 = vadd.xlane.f32.xlu0 %v188
    %v190 = vpop.xlane.xlu0 %189
    %v191 = vsel %vm96, %v187, 0.0
    %192 = vadd.xlane.f32.xlu0 %v191
    %v193 = vpop.xlane.xlu0 %192
    %v194 = vrcp.pop 32.0
    %v195 = vmul.f32 %v190, %v194
    %v196 = vmul.f32 %v193, %v194
    %v197 = vsub.f32 %v186, %v195
    %v198 = vsub.f32 %v187, %v196
    %v199 = vmul.f32 %v197, %v197
    %v200 = vmul.f32 %v198, %v198
    %v201 = vsel %vm96, %v199, 0.0
    %202 = vadd.xlane.f32.xlu0 %v201
    %v203 = vpop.xlane.xlu0 %202
    %v204 = vsel %vm96, %v200, 0.0
    %205 = vadd.xlane.f32.xlu0 %v204
    %v206 = vpop.xlane.xlu0 %205
    %v207 = vmul.f32 %v203, %v194
    %v208 = vmul.f32 %v206, %v194
    %v209 = vadd.f32 %v207, 1e-05
    %v210 = vadd.f32 %v208, 1e-05
    %v211 = vrsqrt.pop %v209
    %v212 = vrsqrt.pop %v210
    %v213 = vmul.f32 %v197, %v211
    %v214 = vmul.f32 %v198, %v212
    %v215 = vld [vmem:[#allocation8] sm:$0x1]
    %v217 = vlaneseq
    %v218 = vshrl.u32 %v217, 7
    %v219 = vsub.s32 0, %v218
    %v220 = vrot.slane %v215, %v219
    %v222 = vmul.f32 %v213, %v220
    %v223 = vmul.f32 %v214, %v220
    %v224 = vld [vmem:[#allocation10] sm:$0x1]
    %v226 = vlaneseq
    %v227 = vshrl.u32 %v226, 7
    %v228 = vsub.s32 0, %v227
    %v229 = vrot.slane %v224, %v228
    %v231 = vadd.f32 %v222, %v229
    %v232 = vadd.f32 %v223, %v229
    %233 = vst.msk [vmem:[#allocation11] sm:$0xff] %vm96, %v231
    %234 = vst.msk [vmem:[#allocation11 + $0x8] sm:$0xff] %vm96, %v232
    // Predicated region
    $region42: #{tpu_custom_call.1} parent=1 // pred_check
      _
    $region43: #{tpu_custom_call.1} parent=1 // pred_check_branch
      %236 = sbr.rel (0) target = $region45
    $region44: #{tpu_custom_call.1} parent=1 // pred_region
      %s238 = ssub.s32 256, 256
      %239 = vsyncadd [#allocation4], %s238
      %s240 = sshll.u32 [#allocation11], 4
      %s241 = int_to_ptr.vmem [resolvable:$true] %s240
      %246 = dma.vmem_to_hbm [thread:$0]  %s241, 256, %s5, [#allocation4], 128, 128, 8
    $region45: #{tpu_custom_call.1} parent=1 // pred_fallthru
      _
    // Predicated region
    $region46: #{tpu_custom_call.1} parent=1 // pred_check
      _
    $region47: #{tpu_custom_call.1} parent=1 // pred_check_branch
      %248 = sbr.rel (0) target = $region49
    $region48: #{tpu_custom_call.1} parent=1 // pred_region
      %249 = dma.done [#allocation4], 256
    $region49: #{tpu_custom_call.1} parent=1 // pred_fallthru
      _
    %250 = vsyncpa [#allocation3], 1
    %251 = vsyncpa [#allocation6], 1
    %252 = vsyncpa [#allocation9], 1
    %253 = vsyncpa [#allocation4], 1

</llo_original>
